<compile_context>
chip_gen: v6e
topology: v6e:2x2x1
jax: 0.10.0
libtpu: 0.0.40
codegen_flags: <defaults>
</compile_context>

<pallas_src>
import math

import jax
import jax.numpy as jnp
from jax.experimental import pallas as pl
from jax.experimental.pallas import tpu as pltpu


# ----------------------------------------------------------------------------
# helpers
# ----------------------------------------------------------------------------
def _pad128(d: int) -> int:
    return ((d + 127) // 128) * 128


def _round_up(x: int, m: int) -> int:
    return ((x + m - 1) // m) * m


# ----------------------------------------------------------------------------
# Fully fused encoder kernel: all DoubleLayer blocks in one kernel body.
#   per block:  h1 = relu(h @ W1' + shift1')
#               h2 = relu(h1 @ W2' + shift2')
#               h  = h2 + h1  (if resnet) else h2
# ----------------------------------------------------------------------------
def make_encoder_kernel(num_layers: int, resnet: bool, matmul_dtype):
    def kernel(*refs):
        # refs = (x_ref, [w1, s1, w2, s2] * num_layers, o_ref)
        x_ref = refs[0]
        o_ref = refs[1 + 4 * num_layers]

        h = x_ref[...]                       # matmul_dtype, resident in vregs
        idx = 1
        for _ in range(num_layers):
            w1 = refs[idx][...]              # (D_in_p, D_out_p) matmul_dtype
            s1 = refs[idx + 1][...]          # (1, D_out_p) f32 (bias+BN folded)
            w2 = refs[idx + 2][...]          # (D_out_p, D_out_p) matmul_dtype
            s2 = refs[idx + 3][...]          # (1, D_out_p) f32
            idx += 4

            h1 = jnp.dot(h.astype(matmul_dtype), w1,
                         preferred_element_type=jnp.float32)
            h1 = jnp.maximum(h1 + s1, 0.0)   # fused bias+BN affine + ReLU (f32)

            h2 = jnp.dot(h1.astype(matmul_dtype), w2,
                         preferred_element_type=jnp.float32)
            h2 = jnp.maximum(h2 + s2, 0.0)

            h = h2 + h1 if resnet else h2    # residual (out2 += out1)

        o_ref[...] = h.astype(o_ref.dtype)

    return kernel


def encoder_forward(x, folded_params, *, out_dim: int, resnet: bool,
                    matmul_dtype=jnp.bfloat16, max_tile_b: int = 256):
    """Single fused pallas_call over the whole encoder, grid over batch."""
    B, D_in = x.shape
    L = len(folded_params)
    D_in_pad = folded_params[0][0].shape[0]
    D_out_pad = folded_params[-1][2].shape[1]
    max_d_pad = max([D_in_pad] + [w2.shape[1] for (_, _, w2, _) in folded_params])

    # batch tiling: sublane-friendly tile, grid shards across cores (v7x)
    tile_b = min(_round_up(B, 8), max_tile_b)
    B_pad = _round_up(B, tile_b)

    # Pad + pre-cast the input to the matmul dtype (kernel's first op was this
    # cast anyway) -> halves input DMA bytes, numerically identical.
    x_pad = jnp.zeros((B_pad, D_in_pad), jnp.float32)
    x_pad = x_pad.at[:B, :D_in].set(x).astype(matmul_dtype)

    flat_params = []
    in_specs = [pl.BlockSpec((tile_b, D_in_pad), lambda i: (i, 0))]
    param_bytes = 0
    for (w1, s1, w2, s2) in folded_params:
        flat_params += [w1, s1, w2, s2]
        # weights/shifts map to block (0,0) for every grid step -> stay resident
        in_specs += [
            pl.BlockSpec(w1.shape, lambda i: (0, 0)),
            pl.BlockSpec(s1.shape, lambda i: (0, 0)),
            pl.BlockSpec(w2.shape, lambda i: (0, 0)),
            pl.BlockSpec(s2.shape, lambda i: (0, 0)),
        ]
        for p in (w1, s1, w2, s2):
            param_bytes += p.size * p.dtype.itemsize
    out_spec = pl.BlockSpec((tile_b, D_out_pad), lambda i: (i, 0))

    # VMEM budget: params (double-buffered by BlockSpec) + in/out activation
    # tiles (double-buffered) + per-layer f32 intermediates, with margin.
    act_bytes = 2 * 2 * tile_b * max_d_pad * 4
    vmem_limit = min(int(1.5 * (2 * param_bytes + act_bytes)) + (4 << 20),
                     96 << 20)

    kernel = make_encoder_kernel(L, resnet, matmul_dtype)
    out_pad = pl.pallas_call(
        kernel,
        out_shape=jax.ShapeDtypeStruct((B_pad, D_out_pad), jnp.float32),
        grid=(B_pad // tile_b,),
        in_specs=in_specs,
        out_specs=out_spec,
        compiler_params=pltpu.CompilerParams(
            dimension_semantics=("parallel",),
            vmem_limit_bytes=vmem_limit),
    )(x_pad, *flat_params)

    return out_pad[:B, :out_dim]


# ----------------------------------------------------------------------------
# Parameter construction (deterministic, PyTorch-like shapes/init)
# ----------------------------------------------------------------------------
def _linear_params(key, in_dim, out_dim):
    """nn.Linear init; weight stored transposed as (in, out) for x @ W."""
    kw, kb = jax.random.split(key)
    bound = 1.0 / math.sqrt(in_dim)
    w = jax.random.uniform(kw, (in_dim, out_dim), jnp.float32, -bound, bound)
    b = jax.random.uniform(kb, (out_dim,), jnp.float32, -bound, bound)
    return w, b


def _bn_affine(key, dim, batch_norm: bool):
    """BatchNorm1d (eval mode) folded to per-feature (scale, shift)."""
    if not batch_norm:
        return jnp.ones((dim,), jnp.float32), jnp.zeros((dim,), jnp.float32)
    kg, kb, km, kv = jax.random.split(key, 4)
    gamma = 1.0 + 0.1 * jax.random.normal(kg, (dim,), jnp.float32)
    beta = 0.1 * jax.random.normal(kb, (dim,), jnp.float32)
    running_mean = 0.1 * jax.random.normal(km, (dim,), jnp.float32)
    running_var = jnp.abs(1.0 + 0.1 * jax.random.normal(kv, (dim,), jnp.float32))
    eps = 1e-5
    scale = gamma / jnp.sqrt(running_var + eps)
    shift = beta - running_mean * scale
    return scale, shift


def make_raw_encoder_params(key, in_dim, intermediate_dims, batch_norm: bool):
    assert len(intermediate_dims) > 0
    dims = [in_dim] + list(intermediate_dims)
    blocks = []
    for i in range(len(dims) - 1):
        d_in, d_out = dims[i], dims[i + 1]
        key, k1, k2, k3, k4 = jax.random.split(key, 5)
        blocks.append((
            _linear_params(k1, d_in, d_out),    # (w1, b1)
            _bn_affine(k2, d_out, batch_norm),  # (s1, t1)
            _linear_params(k3, d_out, d_out),   # (w2, b2)
            _bn_affine(k4, d_out, batch_norm),  # (s2, t2)
        ))
    return blocks


def fold_and_pad_params(raw_blocks, matmul_dtype=jnp.bfloat16):
    """Fold bias+BN into weights and zero-pad feature dims to multiples of 128."""
    folded = []
    for (w1, b1), (s1, t1), (w2, b2), (s2, t2) in raw_blocks:
        d_in, d_out = w1.shape
        fw1 = w1 * s1[None, :]
        fb1 = b1 * s1 + t1
        fw2 = w2 * s2[None, :]
        fb2 = b2 * s2 + t2

        d_in_p, d_out_p = _pad128(d_in), _pad128(d_out)
        W1 = jnp.zeros((d_in_p, d_out_p), jnp.float32)
        W1 = W1.at[:d_in, :d_out].set(fw1).astype(matmul_dtype)
        S1 = jnp.zeros((1, d_out_p), jnp.float32).at[0, :d_out].set(fb1)
        W2 = jnp.zeros((d_out_p, d_out_p), jnp.float32)
        W2 = W2.at[:d_out, :d_out].set(fw2).astype(matmul_dtype)
        S2 = jnp.zeros((1, d_out_p), jnp.float32).at[0, :d_out].set(fb2)
        folded.append((W1, S1, W2, S2))
    return folded


# ----------------------------------------------------------------------------
# Pure-JAX references for correctness checks
# ----------------------------------------------------------------------------
def encoder_reference_padded(x, folded_params, *, out_dim, resnet):
    """Exact same math as the kernel (folded, padded, bf16 matmuls)."""
    B, D_in = x.shape
    D_in_pad = folded_params[0][0].shape[0]
    h = jnp.zeros((B, D_in_pad), jnp.float32).at[:, :D_in].set(x)
    h = h.astype(folded_params[0][0].dtype)
    for (W1, S1, W2, S2) in folded_params:
        h1 = jnp.maximum(jnp.dot(h.astype(W1.dtype), W1,
                                 preferred_element_type=jnp.float32) + S1, 0.0)
        h2 = jnp.maximum(jnp.dot(h1.astype(W2.dtype), W2,
                                 preferred_element_type=jnp.float32) + S2, 0.0)
        h = h2 + h1 if resnet else h2
    return h[:, :out_dim]


def encoder_reference_f32(x, raw_blocks, *, resnet):
    """Full-precision unfolded reference (module semantics in f32)."""
    h = x
    for (w1, b1), (s1, t1), (w2, b2), (s2, t2) in raw_blocks:
        h1 = jnp.maximum((h @ w1 + b1) * s1 + t1, 0.0)
        h2 = jnp.maximum((h1 @ w2 + b2) * s2 + t2, 0.0)
        h = h2 + h1 if resnet else h2
    return h


if __name__ == "__main__":
    key = jax.random.PRNGKey(0)
    k_x, k_p = jax.random.split(key)

    # Small shapes consistent with the module: x is (batch, in_dim)
    B, IN_DIM = 8, 32
    INTERMEDIATE_DIMS = [64, 64]
    OUT_DIM_ARG = 16       # present in Encoder.__init__ signature; unused in forward
    RESNET = True
    BATCH_NORM = True
    MATMUL_DTYPE = jnp.bfloat16

    x = jax.random.normal(k_x, (B, IN_DIM), jnp.float32)
    raw_params = make_raw_encoder_params(k_p, IN_DIM, INTERMEDIATE_DIMS, BATCH_NORM)
    folded_params = fold_and_pad_params(raw_params, MATMUL_DTYPE)

    out = encoder_forward(x, folded_params, out_dim=INTERMEDIATE_DIMS[-1],
                          resnet=RESNET, matmul_dtype=MATMUL_DTYPE)
    out = jax.block_until_ready(out)
    assert out.shape == (B, INTERMEDIATE_DIMS[-1]), out.shape

    # Exact-math reference (same folded/padded/bf16 computation).
    ref_exact = encoder_reference_padded(x, folded_params,
                                         out_dim=INTERMEDIATE_DIMS[-1],
                                         resnet=RESNET)
    assert jnp.allclose(out, ref_exact, atol=1e-4, rtol=1e-4), float(
        jnp.max(jnp.abs(out - ref_exact)))

    # Sanity check vs. full-precision module semantics (bf16 matmul tolerance).
    ref_f32 = encoder_reference_f32(x, raw_params, resnet=RESNET)
    assert jnp.allclose(out, ref_f32, atol=5e-2, rtol=5e-2), float(
        jnp.max(jnp.abs(out - ref_f32)))

    print("KERNEL_OK")
</pallas_src>

<mosaic_0001>
module attributes {stable_mosaic.version = 11 : i64} {
  func.func @kernel(%arg0: i32, %arg1: memref<8x128xbf16, #tpu.memory_space<vmem>>, %arg2: memref<128x128xbf16, #tpu.memory_space<vmem>>, %arg3: memref<1x128xf32, #tpu.memory_space<vmem>>, %arg4: memref<128x128xbf16, #tpu.memory_space<vmem>>, %arg5: memref<1x128xf32, #tpu.memory_space<vmem>>, %arg6: memref<128x128xbf16, #tpu.memory_space<vmem>>, %arg7: memref<1x128xf32, #tpu.memory_space<vmem>>, %arg8: memref<128x128xbf16, #tpu.memory_space<vmem>>, %arg9: memref<1x128xf32, #tpu.memory_space<vmem>>, %arg10: memref<8x128xf32, #tpu.memory_space<vmem>>) attributes {dimension_semantics = [#tpu.dimension_semantics<parallel>], iteration_bounds = array<i64: 1>, scalar_prefetch = 0 : i64, scratch_operands = 0 : i64, tpu.core_type = #tpu.core_type<tc>, window_params = [{transform_indices = @transform_0, window_bounds = array<i64: 8, 128>}, {pipeline_mode = #tpu.pipeline_mode<synchronous>, transform_indices = @transform_1, window_bounds = array<i64: 128, 128>}, {pipeline_mode = #tpu.pipeline_mode<synchronous>, transform_indices = @transform_2, window_bounds = array<i64: 1, 128>}, {pipeline_mode = #tpu.pipeline_mode<synchronous>, transform_indices = @transform_3, window_bounds = array<i64: 128, 128>}, {pipeline_mode = #tpu.pipeline_mode<synchronous>, transform_indices = @transform_4, window_bounds = array<i64: 1, 128>}, {pipeline_mode = #tpu.pipeline_mode<synchronous>, transform_indices = @transform_5, window_bounds = array<i64: 128, 128>}, {pipeline_mode = #tpu.pipeline_mode<synchronous>, transform_indices = @transform_6, window_bounds = array<i64: 1, 128>}, {pipeline_mode = #tpu.pipeline_mode<synchronous>, transform_indices = @transform_7, window_bounds = array<i64: 128, 128>}, {pipeline_mode = #tpu.pipeline_mode<synchronous>, transform_indices = @transform_8, window_bounds = array<i64: 1, 128>}, {transform_indices = @transform_9, window_bounds = array<i64: 8, 128>}]} {
    %c0 = arith.constant 0 : index
    %c0_0 = arith.constant 0 : index
    %0 = vector.load %arg1[%c0, %c0_0] : memref<8x128xbf16, #tpu.memory_space<vmem>>, vector<8x128xbf16>
    %c0_1 = arith.constant 0 : index
    %c0_2 = arith.constant 0 : index
    %1 = vector.load %arg2[%c0_1, %c0_2] : memref<128x128xbf16, #tpu.memory_space<vmem>>, vector<128x128xbf16>
    %c0_3 = arith.constant 0 : index
    %c0_4 = arith.constant 0 : index
    %2 = vector.load %arg3[%c0_3, %c0_4] : memref<1x128xf32, #tpu.memory_space<vmem>>, vector<1x128xf32>
    %c0_5 = arith.constant 0 : index
    %c0_6 = arith.constant 0 : index
    %3 = vector.load %arg4[%c0_5, %c0_6] : memref<128x128xbf16, #tpu.memory_space<vmem>>, vector<128x128xbf16>
    %c0_7 = arith.constant 0 : index
    %c0_8 = arith.constant 0 : index
    %4 = vector.load %arg5[%c0_7, %c0_8] : memref<1x128xf32, #tpu.memory_space<vmem>>, vector<1x128xf32>
    %cst = arith.constant dense<0.000000e+00> : vector<8x128xf32>
    %5 = tpu.matmul %0, %1, %cst {dimension_numbers = #tpu.dot_dimension_numbers<[1], [0], [0], [1], [0, 0, 1, 1], [], []>} : vector<8x128xbf16>, vector<128x128xbf16>, vector<8x128xf32> -> vector<8x128xf32>
    %6 = vector.broadcast %2 : vector<1x128xf32> to vector<8x128xf32>
    %7 = arith.addf %5, %6 : vector<8x128xf32>
    %cst_9 = arith.constant 0.000000e+00 : f32
    %8 = vector.broadcast %cst_9 : f32 to vector<8x128xf32>
    %9 = arith.maximumf %7, %8 : vector<8x128xf32>
    %10 = arith.truncf %9 : vector<8x128xf32> to vector<8x128xbf16>
    %cst_10 = arith.constant dense<0.000000e+00> : vector<8x128xf32>
    %11 = tpu.matmul %10, %3, %cst_10 {dimension_numbers = #tpu.dot_dimension_numbers<[1], [0], [0], [1], [0, 0, 1, 1], [], []>} : vector<8x128xbf16>, vector<128x128xbf16>, vector<8x128xf32> -> vector<8x128xf32>
    %12 = vector.broadcast %4 : vector<1x128xf32> to vector<8x128xf32>
    %13 = arith.addf %11, %12 : vector<8x128xf32>
    %cst_11 = arith.constant 0.000000e+00 : f32
    %14 = vector.broadcast %cst_11 : f32 to vector<8x128xf32>
    %15 = arith.maximumf %13, %14 : vector<8x128xf32>
    %16 = arith.addf %15, %9 : vector<8x128xf32>
    %c0_12 = arith.constant 0 : index
    %c0_13 = arith.constant 0 : index
    %17 = vector.load %arg6[%c0_12, %c0_13] : memref<128x128xbf16, #tpu.memory_space<vmem>>, vector<128x128xbf16>
    %c0_14 = arith.constant 0 : index
    %c0_15 = arith.constant 0 : index
    %18 = vector.load %arg7[%c0_14, %c0_15] : memref<1x128xf32, #tpu.memory_space<vmem>>, vector<1x128xf32>
    %c0_16 = arith.constant 0 : index
    %c0_17 = arith.constant 0 : index
    %19 = vector.load %arg8[%c0_16, %c0_17] : memref<128x128xbf16, #tpu.memory_space<vmem>>, vector<128x128xbf16>
    %c0_18 = arith.constant 0 : index
    %c0_19 = arith.constant 0 : index
    %20 = vector.load %arg9[%c0_18, %c0_19] : memref<1x128xf32, #tpu.memory_space<vmem>>, vector<1x128xf32>
    %21 = arith.truncf %16 : vector<8x128xf32> to vector<8x128xbf16>
    %cst_20 = arith.constant dense<0.000000e+00> : vector<8x128xf32>
    %22 = tpu.matmul %21, %17, %cst_20 {dimension_numbers = #tpu.dot_dimension_numbers<[1], [0], [0], [1], [0, 0, 1, 1], [], []>} : vector<8x128xbf16>, vector<128x128xbf16>, vector<8x128xf32> -> vector<8x128xf32>
    %23 = vector.broadcast %18 : vector<1x128xf32> to vector<8x128xf32>
    %24 = arith.addf %22, %23 : vector<8x128xf32>
    %cst_21 = arith.constant 0.000000e+00 : f32
    %25 = vector.broadcast %cst_21 : f32 to vector<8x128xf32>
    %26 = arith.maximumf %24, %25 : vector<8x128xf32>
    %27 = arith.truncf %26 : vector<8x128xf32> to vector<8x128xbf16>
    %cst_22 = arith.constant dense<0.000000e+00> : vector<8x128xf32>
    %28 = tpu.matmul %27, %19, %cst_22 {dimension_numbers = #tpu.dot_dimension_numbers<[1], [0], [0], [1], [0, 0, 1, 1], [], []>} : vector<8x128xbf16>, vector<128x128xbf16>, vector<8x128xf32> -> vector<8x128xf32>
    %29 = vector.broadcast %20 : vector<1x128xf32> to vector<8x128xf32>
    %30 = arith.addf %28, %29 : vector<8x128xf32>
    %cst_23 = arith.constant 0.000000e+00 : f32
    %31 = vector.broadcast %cst_23 : f32 to vector<8x128xf32>
    %32 = arith.maximumf %30, %31 : vector<8x128xf32>
    %33 = arith.addf %32, %26 : vector<8x128xf32>
    %c0_24 = arith.constant 0 : index
    %c0_25 = arith.constant 0 : index
    %34 = vector.load %arg10[%c0_24, %c0_25] : memref<8x128xf32, #tpu.memory_space<vmem>>, vector<8x128xf32>
    tpu.vector_store %arg10[%c0_24, %c0_25], %33 {strides = array<i32>} : memref<8x128xf32, #tpu.memory_space<vmem>>, vector<8x128xf32>,
    return
  }
  func.func @transform_0(%arg0: i32) -> (i32, i32) {
    %c0_i32 = arith.constant 0 : i32
    %c0_i32_0 = arith.constant 0 : i32
    return %arg0, %c0_i32 : i32, i32
  }
  func.func @transform_1(%arg0: i32) -> (i32, i32) {
    %c0_i32 = arith.constant 0 : i32
    %c0_i32_0 = arith.constant 0 : i32
    %c0_i32_1 = arith.constant 0 : i32
    return %c0_i32, %c0_i32_0 : i32, i32
  }
  func.func @transform_2(%arg0: i32) -> (i32, i32) {
    %c0_i32 = arith.constant 0 : i32
    %c0_i32_0 = arith.constant 0 : i32
    %c0_i32_1 = arith.constant 0 : i32
    return %c0_i32, %c0_i32_0 : i32, i32
  }
  func.func @transform_3(%arg0: i32) -> (i32, i32) {
    %c0_i32 = arith.constant 0 : i32
    %c0_i32_0 = arith.constant 0 : i32
    %c0_i32_1 = arith.constant 0 : i32
    return %c0_i32, %c0_i32_0 : i32, i32
  }
  func.func @transform_4(%arg0: i32) -> (i32, i32) {
    %c0_i32 = arith.constant 0 : i32
    %c0_i32_0 = arith.constant 0 : i32
    %c0_i32_1 = arith.constant 0 : i32
    return %c0_i32, %c0_i32_0 : i32, i32
  }
  func.func @transform_5(%arg0: i32) -> (i32, i32) {
    %c0_i32 = arith.constant 0 : i32
    %c0_i32_0 = arith.constant 0 : i32
    %c0_i32_1 = arith.constant 0 : i32
    return %c0_i32, %c0_i32_0 : i32, i32
  }
  func.func @transform_6(%arg0: i32) -> (i32, i32) {
    %c0_i32 = arith.constant 0 : i32
    %c0_i32_0 = arith.constant 0 : i32
    %c0_i32_1 = arith.constant 0 : i32
    return %c0_i32, %c0_i32_0 : i32, i32
  }
  func.func @transform_7(%arg0: i32) -> (i32, i32) {
    %c0_i32 = arith.constant 0 : i32
    %c0_i32_0 = arith.constant 0 : i32
    %c0_i32_1 = arith.constant 0 : i32
    return %c0_i32, %c0_i32_0 : i32, i32
  }
  func.func @transform_8(%arg0: i32) -> (i32, i32) {
    %c0_i32 = arith.constant 0 : i32
    %c0_i32_0 = arith.constant 0 : i32
    %c0_i32_1 = arith.constant 0 : i32
    return %c0_i32, %c0_i32_0 : i32, i32
  }
  func.func @transform_9(%arg0: i32) -> (i32, i32) {
    %c0_i32 = arith.constant 0 : i32
    %c0_i32_0 = arith.constant 0 : i32
    return %arg0, %c0_i32 : i32, i32
  }
}

</mosaic_0001>

<llo_original>
// kernel: tpu_custom_call.1
$region0: #{tpu_custom_call.1}
  #allocation0 [shape = 'u32[]', space=smem, size = 0x4, offset = 0x4, fixed_abs, tag = 'smem constant byte address 0x4 - core index']
  #allocation1 [shape = 'u32[144,128]{1,0:T(1,128)}', space=vmem, size = 0x12000, scoped, tag = 'internal scratch']
  %s0 = inlined_call_operand.hbm [shape: bf16[8,128], index: 0, kind: input, shape index: {}]
  %s1 = inlined_call_operand.hbm [shape: bf16[128,128], index: 1, kind: input, shape index: {}]
  %s2 = inlined_call_operand.vmem [shape: f32[1,128], index: 2, kind: input, shape index: {}]
  %s3 = inlined_call_operand.hbm [shape: bf16[128,128], index: 3, kind: input, shape index: {}]
  %s4 = inlined_call_operand.vmem [shape: f32[1,128], index: 4, kind: input, shape index: {}]
  %s5 = inlined_call_operand.hbm [shape: bf16[128,128], index: 5, kind: input, shape index: {}]
  %s6 = inlined_call_operand.vmem [shape: f32[1,128], index: 6, kind: input, shape index: {}]
  %s7 = inlined_call_operand.hbm [shape: bf16[128,128], index: 7, kind: input, shape index: {}]
  %s8 = inlined_call_operand.vmem [shape: f32[1,128], index: 8, kind: input, shape index: {}]
  %s9 = inlined_call_operand.hbm [shape: f32[8,128], index: 9, kind: output, shape index: {}]
  %s10 = sld [smem:[#allocation0]]
  $region66: #{tpu_custom_call.1} parent=0
    _
  %s12 = ssub.s32 1, %s10
  %s13 = scalar_select 0, %s12, %s10
  $region1: #{tpu_custom_call.1} parent=0
    #allocation2 [shape = 'u8[2048]{0}', space=vmem, size = 0x800, scoped, tag = 'input window, operand 0, single buffered']
    #allocation3 [shape = 's32[1]{0}', space=sflag, size = 0x4, scoped, tag = 'scoped memory for tpu_custom_call.1']
    #allocation4 [shape = 's32[1]{0}', space=sflag, size = 0x4, scoped, tag = 'scoped memory for tpu_custom_call.1']
    #allocation5 [shape = 'u8[32768]{0}', space=vmem, size = 0x8000, scoped, tag = 'input window, operand 1, single buffered']
    #allocation6 [shape = 's32[1]{0}', space=sflag, size = 0x4, scoped, tag = 'scoped memory for tpu_custom_call.1']
    #allocation7 [shape = 'u8[32768]{0}', space=vmem, size = 0x8000, scoped, tag = 'input window, operand 3, single buffered']
    #allocation8 [shape = 'u8[32768]{0}', space=vmem, size = 0x8000, scoped, tag = 'input window, operand 5, single buffered']
    #allocation9 [shape = 's32[1]{0}', space=sflag, size = 0x4, scoped, tag = 'scoped memory for tpu_custom_call.1']
    #allocation10 [shape = 'u8[32768]{0}', space=vmem, size = 0x8000, scoped, tag = 'input window, operand 7, single buffered']
    #allocation11 [shape = 'u8[4096]{0}', space=vmem, size = 0x1000, scoped, tag = 'output window, operand 0, single buffered']
    %14 = vsyncpa [#allocation3], 0
    %15 = vsyncpa [#allocation6], 0
    %16 = vsyncpa [#allocation9], 0
    %17 = vsyncpa [#allocation4], 0
    // Predicated region
    $region2: #{tpu_custom_call.1} parent=1 // pred_check
      _
    $region3: #{tpu_custom_call.1} parent=1 // pred_check_branch
      %19 = sbr.rel (0) target = $region5
    $region4: #{tpu_custom_call.1} parent=1 // pred_region
      %s21 = ssub.s32 64, 64
      %22 = vsyncadd [#allocation3], %s21
      %s24 = sshll.u32 [#allocation2], 4
      %s25 = int_to_ptr.vmem [resolvable:$true] %s24
      %27 = dma.hbm_to_vmem [thread:$0]  %s0, 64, %s25, [#allocation3]
    $region5: #{tpu_custom_call.1} parent=1 // pred_fallthru
      _
    // Predicated region
    $region6: #{tpu_custom_call.1} parent=1 // pred_check
      _
    $region7: #{tpu_custom_call.1} parent=1 // pred_check_branch
      %29 = sbr.rel (0) target = $region9
    $region8: #{tpu_custom_call.1} parent=1 // pred_region
      %s31 = ssub.s32 1024, 1024
      %32 = vsyncadd [#allocation6], %s31
      %s33 = sshll.u32 [#allocation5], 4
      %s34 = int_to_ptr.vmem [resolvable:$true] %s33
      %39 = dma.hbm_to_vmem [thread:$0]  %s1, 1024, %s34, [#allocation6], 64, 64, 4
    $region9: #{tpu_custom_call.1} parent=1 // pred_fallthru
      _
    // Predicated region
    $region10: #{tpu_custom_call.1} parent=1 // pred_check
      _
    $region11: #{tpu_custom_call.1} parent=1 // pred_check_branch
      %41 = sbr.rel (0) target = $region13
    $region12: #{tpu_custom_call.1} parent=1 // pred_region
      _
    $region13: #{tpu_custom_call.1} parent=1 // pred_fallthru
      _
    // Predicated region
    $region14: #{tpu_custom_call.1} parent=1 // pred_check
      _
    $region15: #{tpu_custom_call.1} parent=1 // pred_check_branch
      %43 = sbr.rel (0) target = $region17
    $region16: #{tpu_custom_call.1} parent=1 // pred_region
      %s45 = ssub.s32 1024, 1024
      %46 = vsyncadd [#allocation6], %s45
      %s47 = sshll.u32 [#allocation7], 4
      %s48 = int_to_ptr.vmem [resolvable:$true] %s47
      %53 = dma.hbm_to_vmem [thread:$0]  %s3, 1024, %s48, [#allocation6], 64, 64, 4
    $region17: #{tpu_custom_call.1} parent=1 // pred_fallthru
      _
    // Predicated region
    $region18: #{tpu_custom_call.1} parent=1 // pred_check
      _
    $region19: #{tpu_custom_call.1} parent=1 // pred_check_branch
      %55 = sbr.rel (0) target = $region21
    $region20: #{tpu_custom_call.1} parent=1 // pred_region
      _
    $region21: #{tpu_custom_call.1} parent=1 // pred_fallthru
      _
    // Predicated region
    $region22: #{tpu_custom_call.1} parent=1 // pred_check
      _
    $region23: #{tpu_custom_call.1} parent=1 // pred_check_branch
      %57 = sbr.rel (0) target = $region25
    $region24: #{tpu_custom_call.1} parent=1 // pred_region
      %s59 = ssub.s32 1024, 1024
      %60 = vsyncadd [#allocation9], %s59
      %s61 = sshll.u32 [#allocation8], 4
      %s62 = int_to_ptr.vmem [resolvable:$true] %s61
      %67 = dma.hbm_to_vmem [thread:$0]  %s5, 1024, %s62, [#allocation9], 64, 64, 4
    $region25: #{tpu_custom_call.1} parent=1 // pred_fallthru
      _
    // Predicated region
    $region26: #{tpu_custom_call.1} parent=1 // pred_check
      _
    $region27: #{tpu_custom_call.1} parent=1 // pred_check_branch
      %69 = sbr.rel (0) target = $region29
    $region28: #{tpu_custom_call.1} parent=1 // pred_region
      _
    $region29: #{tpu_custom_call.1} parent=1 // pred_fallthru
      _
    // Predicated region
    $region30: #{tpu_custom_call.1} parent=1 // pred_check
      _
    $region31: #{tpu_custom_call.1} parent=1 // pred_check_branch
      %71 = sbr.rel (0) target = $region33
    $region32: #{tpu_custom_call.1} parent=1 // pred_region
      %s73 = ssub.s32 1024, 1024
      %74 = vsyncadd [#allocation9], %s73
      %s75 = sshll.u32 [#allocation10], 4
      %s76 = int_to_ptr.vmem [resolvable:$true] %s75
      %81 = dma.hbm_to_vmem [thread:$0]  %s7, 1024, %s76, [#allocation9], 64, 64, 4
    $region33: #{tpu_custom_call.1} parent=1 // pred_fallthru
      _
    // Predicated region
    $region34: #{tpu_custom_call.1} parent=1 // pred_check
      _
    $region35: #{tpu_custom_call.1} parent=1 // pred_check_branch
      %83 = sbr.rel (0) target = $region37
    $region36: #{tpu_custom_call.1} parent=1 // pred_region
      _
    $region37: #{tpu_custom_call.1} parent=1 // pred_fallthru
      _
    // Predicated region
    $region38: #{tpu_custom_call.1} parent=1 // pred_check
      _
    $region39: #{tpu_custom_call.1} parent=1 // pred_check_branch
      %85 = sbr.rel (0) target = $region41
    $region40: #{tpu_custom_call.1} parent=1 // pred_region
      %86 = dma.done [#allocation3], 64
    $region41: #{tpu_custom_call.1} parent=1 // pred_fallthru
      _
    // Predicated region
    $region42: #{tpu_custom_call.1} parent=1 // pred_check
      _
    $region43: #{tpu_custom_call.1} parent=1 // pred_check_branch
      %88 = sbr.rel (0) target = $region45
    $region44: #{tpu_custom_call.1} parent=1 // pred_region
      %89 = dma.done [#allocation6], 1024
    $region45: #{tpu_custom_call.1} parent=1 // pred_fallthru
      _
    // Predicated region
    $region46: #{tpu_custom_call.1} parent=1 // pred_check
      _
    $region47: #{tpu_custom_call.1} parent=1 // pred_check_branch
      %91 = sbr.rel (0) target = $region49
    $region48: #{tpu_custom_call.1} parent=1 // pred_region
      %92 = dma.done [#allocation6], 1024
    $region49: #{tpu_custom_call.1} parent=1 // pred_fallthru
      _
    // Predicated region
    $region50: #{tpu_custom_call.1} parent=1 // pred_check
      _
    $region51: #{tpu_custom_call.1} parent=1 // pred_check_branch
      %94 = sbr.rel (0) target = $region53
    $region52: #{tpu_custom_call.1} parent=1 // pred_region
      %95 = dma.done [#allocation9], 1024
    $region53: #{tpu_custom_call.1} parent=1 // pred_fallthru
      _
    // Predicated region
    $region54: #{tpu_custom_call.1} parent=1 // pred_check
      _
    $region55: #{tpu_custom_call.1} parent=1 // pred_check_branch
      %97 = sbr.rel (0) target = $region57
    $region56: #{tpu_custom_call.1} parent=1 // pred_region
      %98 = dma.done [#allocation9], 1024
    $region57: #{tpu_custom_call.1} parent=1 // pred_fallthru
      _
    %v100 = vld [vmem:[#allocation2] sm:$0xf]
    %v101 = vld [vmem:[#allocation5] sm:$0xf]
    %v102 = vld [vmem:[#allocation5 + $0x4] sm:$0xf]
    %v103 = vld [vmem:[#allocation5 + $0x8] sm:$0xf]
    %v104 = vld [vmem:[#allocation5 + $0xc] sm:$0xf]
    %v105 = vld [vmem:[#allocation5 + $0x10] sm:$0xf]
    %v106 = vld [vmem:[#allocation5 + $0x14] sm:$0xf]
    %v107 = vld [vmem:[#allocation5 + $0x18] sm:$0xf]
    %v108 = vld [vmem:[#allocation5 + $0x1c] sm:$0xf]
    %v109 = vld [vmem:[#allocation5 + $0x20] sm:$0xf]
    %v110 = vld [vmem:[#allocation5 + $0x24] sm:$0xf]
    %v111 = vld [vmem:[#allocation5 + $0x28] sm:$0xf]
    %v112 = vld [vmem:[#allocation5 + $0x2c] sm:$0xf]
    %v113 = vld [vmem:[#allocation5 + $0x30] sm:$0xf]
    %v114 = vld [vmem:[#allocation5 + $0x34] sm:$0xf]
    %v115 = vld [vmem:[#allocation5 + $0x38] sm:$0xf]
    %v116 = vld [vmem:[#allocation5 + $0x3c] sm:$0xf]
    %v117 = vld [vmem:[%s2] sm:$0x1]
    %v118 = vld [vmem:[#allocation7] sm:$0xf]
    %v119 = vld [vmem:[#allocation7 + $0x4] sm:$0xf]
    %v120 = vld [vmem:[#allocation7 + $0x8] sm:$0xf]
    %v121 = vld [vmem:[#allocation7 + $0xc] sm:$0xf]
    %v122 = vld [vmem:[#allocation7 + $0x10] sm:$0xf]
    %v123 = vld [vmem:[#allocation7 + $0x14] sm:$0xf]
    %v124 = vld [vmem:[#allocation7 + $0x18] sm:$0xf]
    %v125 = vld [vmem:[#allocation7 + $0x1c] sm:$0xf]
    %v126 = vld [vmem:[#allocation7 + $0x20] sm:$0xf]
    %v127 = vld [vmem:[#allocation7 + $0x24] sm:$0xf]
    %v128 = vld [vmem:[#allocation7 + $0x28] sm:$0xf]
    %v129 = vld [vmem:[#allocation7 + $0x2c] sm:$0xf]
    %v130 = vld [vmem:[#allocation7 + $0x30] sm:$0xf]
    %v131 = vld [vmem:[#allocation7 + $0x34] sm:$0xf]
    %v132 = vld [vmem:[#allocation7 + $0x38] sm:$0xf]
    %v133 = vld [vmem:[#allocation7 + $0x3c] sm:$0xf]
    %v134 = vld [vmem:[%s4] sm:$0x1]
    %v136 = vlaneseq
    %v137 = vshrl.u32 %v136, 7
    %v138 = vsub.s32 0, %v137
    %v139 = vrot.slane %v117, %v138
    %v157 = vunpack.c.l.b16 %v101
    %v158 = vunpack.c.l.b16 %v102
    %v159 = vunpack.c.l.b16 %v103
    %v160 = vunpack.c.l.b16 %v104
    %v161 = vunpack.c.l.b16 %v105
    %v162 = vunpack.c.l.b16 %v106
    %v163 = vunpack.c.l.b16 %v107
    %v164 = vunpack.c.l.b16 %v108
    %v165 = vunpack.c.l.b16 %v109
    %v166 = vunpack.c.l.b16 %v110
    %v167 = vunpack.c.l.b16 %v111
    %v168 = vunpack.c.l.b16 %v112
    %v169 = vunpack.c.l.b16 %v113
    %v170 = vunpack.c.l.b16 %v114
    %v171 = vunpack.c.l.b16 %v115
    %v172 = vunpack.c.l.b16 %v116
    %v173 = vpack.c.b16 %v158, %v157
    %v174 = vpack.c.b16 %v160, %v159
    %v175 = vpack.c.b16 %v162, %v161
    %v176 = vpack.c.b16 %v164, %v163
    %v177 = vpack.c.b16 %v166, %v165
    %v178 = vpack.c.b16 %v168, %v167
    %v179 = vpack.c.b16 %v170, %v169
    %v180 = vpack.c.b16 %v172, %v171
    %189 = vmatprep.subr.bf16.mxu0 0
    %190 = vmatpush1.bf16.msra.mxu0 %v180
    %191 = vmatprep.subr.bf16.mxu0 0
    %192 = vmatpush1.bf16.msra.mxu0 %v179
    %193 = vmatprep.subr.bf16.mxu0 0
    %194 = vmatpush1.bf16.msra.mxu0 %v178
    %195 = vmatprep.subr.bf16.mxu0 0
    %196 = vmatpush1.bf16.msra.mxu0 %v177
    %197 = vmatprep.subr.bf16.mxu0 0
    %198 = vmatpush1.bf16.msra.mxu0 %v176
    %199 = vmatprep.subr.bf16.mxu0 0
    %200 = vmatpush1.bf16.msra.mxu0 %v175
    %201 = vmatprep.subr.bf16.mxu0 0
    %202 = vmatpush1.bf16.msra.mxu0 %v174
    %203 = vmatprep.subr.bf16.mxu0 0
    %204 = vmatpush1.bf16.msra.mxu0 %v173
    %205 = vmatprep.subr.bf16.mxu0 0
    %206 = vmatpush2.bf16.msra.mxu0 0
    %207 = vmatprep.subr.bf16.mxu0 0
    %208 = vmatpush2.bf16.msra.mxu0 0
    %209 = vmatprep.subr.bf16.mxu0 0
    %210 = vmatpush2.bf16.msra.mxu0 0
    %211 = vmatprep.subr.bf16.mxu0 0
    %212 = vmatpush2.bf16.msra.mxu0 0
    %213 = vmatprep.subr.bf16.mxu0 0
    %214 = vmatpush2.bf16.msra.mxu0 0
    %215 = vmatprep.subr.bf16.mxu0 0
    %216 = vmatpush2.bf16.msra.mxu0 0
    %217 = vmatprep.subr.bf16.mxu0 0
    %218 = vmatpush2.bf16.msra.mxu0 0
    %219 = vmatprep.subr.bf16.mxu0 0
    %220 = vmatpush2.bf16.msra.mxu0 0
    %221 = vmatprep.mubr.bf16.mxu0 0
    %222 = vmatmul.mubr.bf16.gmra.mxu0 %v100
    %v223 = vpop.f32.mrf.mxu0
    %v224 = vadd.f32 %v139, %v223
    %v225 = vpop.f32.mrf.mxu0
    %v226 = vpop.f32.mrf.mxu0
    %v227 = vpop.f32.mrf.mxu0
    %228 = vdwg.mxu0
    %v229 = vmax.f32 %v224, 0.0
    %v230 = vpack.c.bf16 %v229, %v229
    %v232 = vlaneseq
    %v233 = vshrl.u32 %v232, 7
    %v234 = vsub.s32 0, %v233
    %v235 = vrot.slane %v134, %v234
    %v253 = vunpack.c.l.b16 %v118
    %v254 = vunpack.c.l.b16 %v119
    %v255 = vunpack.c.l.b16 %v120
    %v256 = vunpack.c.l.b16 %v121
    %v257 = vunpack.c.l.b16 %v122
    %v258 = vunpack.c.l.b16 %v123
    %v259 = vunpack.c.l.b16 %v124
    %v260 = vunpack.c.l.b16 %v125
    %v261 = vunpack.c.l.b16 %v126
    %v262 = vunpack.c.l.b16 %v127
    %v263 = vunpack.c.l.b16 %v128
    %v264 = vunpack.c.l.b16 %v129
    %v265 = vunpack.c.l.b16 %v130
    %v266 = vunpack.c.l.b16 %v131
    %v267 = vunpack.c.l.b16 %v132
    %v268 = vunpack.c.l.b16 %v133
    %v269 = vpack.c.b16 %v254, %v253
    %v270 = vpack.c.b16 %v256, %v255
    %v271 = vpack.c.b16 %v258, %v257
    %v272 = vpack.c.b16 %v260, %v259
    %v273 = vpack.c.b16 %v262, %v261
    %v274 = vpack.c.b16 %v264, %v263
    %v275 = vpack.c.b16 %v266, %v265
    %v276 = vpack.c.b16 %v268, %v267
    %285 = vmatprep.subr.bf16.mxu0 0
    %286 = vmatpush1.bf16.msra.mxu0 %v276
    %287 = vmatprep.subr.bf16.mxu0 0
    %288 = vmatpush1.bf16.msra.mxu0 %v275
    %289 = vmatprep.subr.bf16.mxu0 0
    %290 = vmatpush1.bf16.msra.mxu0 %v274
    %291 = vmatprep.subr.bf16.mxu0 0
    %292 = vmatpush1.bf16.msra.mxu0 %v273
    %293 = vmatprep.subr.bf16.mxu0 0
    %294 = vmatpush1.bf16.msra.mxu0 %v272
    %295 = vmatprep.subr.bf16.mxu0 0
    %296 = vmatpush1.bf16.msra.mxu0 %v271
    %297 = vmatprep.subr.bf16.mxu0 0
    %298 = vmatpush1.bf16.msra.mxu0 %v270
    %299 = vmatprep.subr.bf16.mxu0 0
    %300 = vmatpush1.bf16.msra.mxu0 %v269
    %301 = vmatprep.subr.bf16.mxu0 0
    %302 = vmatpush2.bf16.msra.mxu0 0
    %303 = vmatprep.subr.bf16.mxu0 0
    %304 = vmatpush2.bf16.msra.mxu0 0
    %305 = vmatprep.subr.bf16.mxu0 0
    %306 = vmatpush2.bf16.msra.mxu0 0
    %307 = vmatprep.subr.bf16.mxu0 0
    %308 = vmatpush2.bf16.msra.mxu0 0
    %309 = vmatprep.subr.bf16.mxu0 0
    %310 = vmatpush2.bf16.msra.mxu0 0
    %311 = vmatprep.subr.bf16.mxu0 0
    %312 = vmatpush2.bf16.msra.mxu0 0
    %313 = vmatprep.subr.bf16.mxu0 0
    %314 = vmatpush2.bf16.msra.mxu0 0
    %315 = vmatprep.subr.bf16.mxu0 0
    %316 = vmatpush2.bf16.msra.mxu0 0
    %317 = vmatprep.mubr.bf16.mxu0 0
    %318 = vmatmul.mubr.bf16.gmra.mxu0 %v230
    %v319 = vpop.f32.mrf.mxu0
    %v320 = vadd.f32 %v235, %v319
    %v321 = vpop.f32.mrf.mxu0
    %v322 = vpop.f32.mrf.mxu0
    %v323 = vpop.f32.mrf.mxu0
    %324 = vdwg.mxu0
    %v325 = vmax.f32 %v320, 0.0
    %v326 = vadd.f32 %v325, %v229
    %v327 = vld [vmem:[#allocation8] sm:$0xf]
    %v328 = vld [vmem:[#allocation8 + $0x4] sm:$0xf]
    %v329 = vld [vmem:[#allocation8 + $0x8] sm:$0xf]
    %v330 = vld [vmem:[#allocation8 + $0xc] sm:$0xf]
    %v331 = vld [vmem:[#allocation8 + $0x10] sm:$0xf]
    %v332 = vld [vmem:[#allocation8 + $0x14] sm:$0xf]
    %v333 = vld [vmem:[#allocation8 + $0x18] sm:$0xf]
    %v334 = vld [vmem:[#allocation8 + $0x1c] sm:$0xf]
    %v335 = vld [vmem:[#allocation8 + $0x20] sm:$0xf]
    %v336 = vld [vmem:[#allocation8 + $0x24] sm:$0xf]
    %v337 = vld [vmem:[#allocation8 + $0x28] sm:$0xf]
    %v338 = vld [vmem:[#allocation8 + $0x2c] sm:$0xf]
    %v339 = vld [vmem:[#allocation8 + $0x30] sm:$0xf]
    %v340 = vld [vmem:[#allocation8 + $0x34] sm:$0xf]
    %v341 = vld [vmem:[#allocation8 + $0x38] sm:$0xf]
    %v342 = vld [vmem:[#allocation8 + $0x3c] sm:$0xf]
    %v343 = vld [vmem:[%s6] sm:$0x1]
    %v344 = vld [vmem:[#allocation10] sm:$0xf]
    %v345 = vld [vmem:[#allocation10 + $0x4] sm:$0xf]
    %v346 = vld [vmem:[#allocation10 + $0x8] sm:$0xf]
    %v347 = vld [vmem:[#allocation10 + $0xc] sm:$0xf]
    %v348 = vld [vmem:[#allocation10 + $0x10] sm:$0xf]
    %v349 = vld [vmem:[#allocation10 + $0x14] sm:$0xf]
    %v350 = vld [vmem:[#allocation10 + $0x18] sm:$0xf]
    %v351 = vld [vmem:[#allocation10 + $0x1c] sm:$0xf]
    %v352 = vld [vmem:[#allocation10 + $0x20] sm:$0xf]
    %v353 = vld [vmem:[#allocation10 + $0x24] sm:$0xf]
    %v354 = vld [vmem:[#allocation10 + $0x28] sm:$0xf]
    %v355 = vld [vmem:[#allocation10 + $0x2c] sm:$0xf]
    %v356 = vld [vmem:[#allocation10 + $0x30] sm:$0xf]
    %v357 = vld [vmem:[#allocation10 + $0x34] sm:$0xf]
    %v358 = vld [vmem:[#allocation10 + $0x38] sm:$0xf]
    %v359 = vld [vmem:[#allocation10 + $0x3c] sm:$0xf]
    %v360 = vld [vmem:[%s8] sm:$0x1]
    %v361 = vpack.c.bf16 %v326, %v326
    %v363 = vlaneseq
    %v364 = vshrl.u32 %v363, 7
    %v365 = vsub.s32 0, %v364
    %v366 = vrot.slane %v343, %v365
    %v384 = vunpack.c.l.b16 %v327
    %v385 = vunpack.c.l.b16 %v328
    %v386 = vunpack.c.l.b16 %v329
    %v387 = vunpack.c.l.b16 %v330
    %v388 = vunpack.c.l.b16 %v331
    %v389 = vunpack.c.l.b16 %v332
    %v390 = vunpack.c.l.b16 %v333
    %v391 = vunpack.c.l.b16 %v334
    %v392 = vunpack.c.l.b16 %v335
    %v393 = vunpack.c.l.b16 %v336
    %v394 = vunpack.c.l.b16 %v337
    %v395 = vunpack.c.l.b16 %v338
    %v396 = vunpack.c.l.b16 %v339
    %v397 = vunpack.c.l.b16 %v340
    %v398 = vunpack.c.l.b16 %v341
    %v399 = vunpack.c.l.b16 %v342
    %v400 = vpack.c.b16 %v385, %v384
    %v401 = vpack.c.b16 %v387, %v386
    %v402 = vpack.c.b16 %v389, %v388
    %v403 = vpack.c.b16 %v391, %v390
    %v404 = vpack.c.b16 %v393, %v392
    %v405 = vpack.c.b16 %v395, %v394
    %v406 = vpack.c.b16 %v397, %v396
    %v407 = vpack.c.b16 %v399, %v398
    %416 = vmatprep.subr.bf16.mxu0 0
    %417 = vmatpush1.bf16.msra.mxu0 %v407
    %418 = vmatprep.subr.bf16.mxu0 0
    %419 = vmatpush1.bf16.msra.mxu0 %v406
    %420 = vmatprep.subr.bf16.mxu0 0
    %421 = vmatpush1.bf16.msra.mxu0 %v405
    %422 = vmatprep.subr.bf16.mxu0 0
    %423 = vmatpush1.bf16.msra.mxu0 %v404
    %424 = vmatprep.subr.bf16.mxu0 0
    %425 = vmatpush1.bf16.msra.mxu0 %v403
    %426 = vmatprep.subr.bf16.mxu0 0
    %427 = vmatpush1.bf16.msra.mxu0 %v402
    %428 = vmatprep.subr.bf16.mxu0 0
    %429 = vmatpush1.bf16.msra.mxu0 %v401
    %430 = vmatprep.subr.bf16.mxu0 0
    %431 = vmatpush1.bf16.msra.mxu0 %v400
    %432 = vmatprep.subr.bf16.mxu0 0
    %433 = vmatpush2.bf16.msra.mxu0 0
    %434 = vmatprep.subr.bf16.mxu0 0
    %435 = vmatpush2.bf16.msra.mxu0 0
    %436 = vmatprep.subr.bf16.mxu0 0
    %437 = vmatpush2.bf16.msra.mxu0 0
    %438 = vmatprep.subr.bf16.mxu0 0
    %439 = vmatpush2.bf16.msra.mxu0 0
    %440 = vmatprep.subr.bf16.mxu0 0
    %441 = vmatpush2.bf16.msra.mxu0 0
    %442 = vmatprep.subr.bf16.mxu0 0
    %443 = vmatpush2.bf16.msra.mxu0 0
    %444 = vmatprep.subr.bf16.mxu0 0
    %445 = vmatpush2.bf16.msra.mxu0 0
    %446 = vmatprep.subr.bf16.mxu0 0
    %447 = vmatpush2.bf16.msra.mxu0 0
    %448 = vmatprep.mubr.bf16.mxu0 0
    %449 = vmatmul.mubr.bf16.gmra.mxu0 %v361
    %v450 = vpop.f32.mrf.mxu0
    %v451 = vadd.f32 %v366, %v450
    %v452 = vpop.f32.mrf.mxu0
    %v453 = vpop.f32.mrf.mxu0
    %v454 = vpop.f32.mrf.mxu0
    %455 = vdwg.mxu0
    %v456 = vmax.f32 %v451, 0.0
    %v457 = vpack.c.bf16 %v456, %v456
    %v459 = vlaneseq
    %v460 = vshrl.u32 %v459, 7
    %v461 = vsub.s32 0, %v460
    %v462 = vrot.slane %v360, %v461
    %v480 = vunpack.c.l.b16 %v344
    %v481 = vunpack.c.l.b16 %v345
    %v482 = vunpack.c.l.b16 %v346
    %v483 = vunpack.c.l.b16 %v347
    %v484 = vunpack.c.l.b16 %v348
    %v485 = vunpack.c.l.b16 %v349
    %v486 = vunpack.c.l.b16 %v350
    %v487 = vunpack.c.l.b16 %v351
    %v488 = vunpack.c.l.b16 %v352
    %v489 = vunpack.c.l.b16 %v353
    %v490 = vunpack.c.l.b16 %v354
    %v491 = vunpack.c.l.b16 %v355
    %v492 = vunpack.c.l.b16 %v356
    %v493 = vunpack.c.l.b16 %v357
    %v494 = vunpack.c.l.b16 %v358
    %v495 = vunpack.c.l.b16 %v359
    %v496 = vpack.c.b16 %v481, %v480
    %v497 = vpack.c.b16 %v483, %v482
    %v498 = vpack.c.b16 %v485, %v484
    %v499 = vpack.c.b16 %v487, %v486
    %v500 = vpack.c.b16 %v489, %v488
    %v501 = vpack.c.b16 %v491, %v490
    %v502 = vpack.c.b16 %v493, %v492
    %v503 = vpack.c.b16 %v495, %v494
    %512 = vmatprep.subr.bf16.mxu0 0
    %513 = vmatpush1.bf16.msra.mxu0 %v503
    %514 = vmatprep.subr.bf16.mxu0 0
    %515 = vmatpush1.bf16.msra.mxu0 %v502
    %516 = vmatprep.subr.bf16.mxu0 0
    %517 = vmatpush1.bf16.msra.mxu0 %v501
    %518 = vmatprep.subr.bf16.mxu0 0
    %519 = vmatpush1.bf16.msra.mxu0 %v500
    %520 = vmatprep.subr.bf16.mxu0 0
    %521 = vmatpush1.bf16.msra.mxu0 %v499
    %522 = vmatprep.subr.bf16.mxu0 0
    %523 = vmatpush1.bf16.msra.mxu0 %v498
    %524 = vmatprep.subr.bf16.mxu0 0
    %525 = vmatpush1.bf16.msra.mxu0 %v497
    %526 = vmatprep.subr.bf16.mxu0 0
    %527 = vmatpush1.bf16.msra.mxu0 %v496
    %528 = vmatprep.subr.bf16.mxu0 0
    %529 = vmatpush2.bf16.msra.mxu0 0
    %530 = vmatprep.subr.bf16.mxu0 0
    %531 = vmatpush2.bf16.msra.mxu0 0
    %532 = vmatprep.subr.bf16.mxu0 0
    %533 = vmatpush2.bf16.msra.mxu0 0
    %534 = vmatprep.subr.bf16.mxu0 0
    %535 = vmatpush2.bf16.msra.mxu0 0
    %536 = vmatprep.subr.bf16.mxu0 0
    %537 = vmatpush2.bf16.msra.mxu0 0
    %538 = vmatprep.subr.bf16.mxu0 0
    %539 = vmatpush2.bf16.msra.mxu0 0
    %540 = vmatprep.subr.bf16.mxu0 0
    %541 = vmatpush2.bf16.msra.mxu0 0
    %542 = vmatprep.subr.bf16.mxu0 0
    %543 = vmatpush2.bf16.msra.mxu0 0
    %544 = vmatprep.mubr.bf16.mxu0 0
    %545 = vmatmul.mubr.bf16.gmra.mxu0 %v457
    %v546 = vpop.f32.mrf.mxu0
    %v547 = vadd.f32 %v462, %v546
    %v548 = vpop.f32.mrf.mxu0
    %v549 = vpop.f32.mrf.mxu0
    %v550 = vpop.f32.mrf.mxu0
    %551 = vdwg.mxu0
    %v552 = vmax.f32 %v547, 0.0
    %v553 = vadd.f32 %v552, %v456
    %554 = vst [vmem:[#allocation11] sm:$0xff] %v553
    // Predicated region
    $region58: #{tpu_custom_call.1} parent=1 // pred_check
      _
    $region59: #{tpu_custom_call.1} parent=1 // pred_check_branch
      %556 = sbr.rel (0) target = $region61
    $region60: #{tpu_custom_call.1} parent=1 // pred_region
      %s558 = ssub.s32 128, 128
      %559 = vsyncadd [#allocation4], %s558
      %s561 = sshll.u32 [#allocation11], 4
      %s562 = int_to_ptr.vmem [resolvable:$true] %s561
      %564 = dma.vmem_to_hbm [thread:$0]  %s562, 128, %s9, [#allocation4]
    $region61: #{tpu_custom_call.1} parent=1 // pred_fallthru
      _
    // Predicated region
    $region62: #{tpu_custom_call.1} parent=1 // pred_check
      _
    $region63: #{tpu_custom_call.1} parent=1 // pred_check_branch
      %566 = sbr.rel (0) target = $region65
    $region64: #{tpu_custom_call.1} parent=1 // pred_region
      %567 = dma.done [#allocation4], 128
    $region65: #{tpu_custom_call.1} parent=1 // pred_fallthru
      _
    %568 = vsyncpa [#allocation3], 1
    %569 = vsyncpa [#allocation6], 1
    %570 = vsyncpa [#allocation9], 1
    %571 = vsyncpa [#allocation4], 1

</llo_original>
